<compile_context>
chip_gen: v6e
topology: v6e:2x2x1
jax: 0.10.0
libtpu: 0.0.40
codegen_flags: <defaults>
</compile_context>

<pallas_src>
import math

import jax
import jax.numpy as jnp
from jax.experimental import pallas as pl
from jax.experimental.pallas import tpu as pltpu

A_VALUE = 0.001          # leaky slope from module __init__ default
ONE_SIXTH = 1.0 / 6.0

TARGET_BLOCK_BYTES = 2 * 1024 * 1024   # ~2 MiB block; 4 live buffers = ~8 MiB
MIN_GRID_STEPS = 4                     # prefer >=4 grid steps on large inputs
LANE_CANDIDATES = (512, 256, 128)      # lane-dense widths (multiples of 128)


def _leaky_hswish_kernel(x_ref, o_ref):
    x = x_ref[...]
    y = x + jnp.asarray(3.0, x.dtype)
    # Leaky_ReLU6(y) = min(6, max(a*y, y))
    lr6 = jnp.minimum(jnp.asarray(6.0, x.dtype),
                      jnp.maximum(jnp.asarray(A_VALUE, x.dtype) * y, y))
    o_ref[...] = x * lr6 * jnp.asarray(ONE_SIXTH, x.dtype)


def _cdiv(a, b):
    return -(-a // b)


def _round_up(a, b):
    return _cdiv(a, b) * b


def leaky_hswish(x):
    """x: any-shape float array (e.g. NCHW). Returns same shape/dtype."""
    orig_shape = x.shape
    dtype = x.dtype
    n = int(math.prod(orig_shape)) if orig_shape else 1

    itemsize = jnp.dtype(dtype).itemsize
    sublane = {4: 8, 2: 16, 1: 32}.get(itemsize, 8)   # dtype-aware min sublanes

    # --- lane-dense factorization; metadata-only reshape when possible ---
    lanes = next((c for c in LANE_CANDIDATES if n % c == 0), None)
    flat = x.reshape(-1)
    padded = False
    if lanes is None:
        # genuinely ragged size: minimal pad to a multiple of 128 lanes
        lanes = 128
        n_pad = _round_up(n, lanes)
        flat = jnp.pad(flat, (0, n_pad - n))
        padded = True
    else:
        n_pad = n
    rows = n_pad // lanes
    x2d = flat.reshape(rows, lanes)

    # --- tile rows: ~TARGET_BLOCK_BYTES per block, sublane-aligned ---
    max_rows = max(sublane,
                   (TARGET_BLOCK_BYTES // (lanes * itemsize)) // sublane * sublane)

    if rows <= max_rows and rows % sublane != 0:
        # whole slab as one full-dims block ((8,128) rule waived); no row pad
        tile_r = rows
    else:
        desired = _round_up(_cdiv(rows, MIN_GRID_STEPS), sublane)
        tile_r = max(sublane, min(max_rows, desired))
    grid = (_cdiv(rows, tile_r),)       # ragged last block handled by masking

    out2d = pl.pallas_call(
        _leaky_hswish_kernel,
        out_shape=jax.ShapeDtypeStruct((rows, lanes), dtype),
        grid_spec=pl.GridSpec(
            grid=grid,
            in_specs=[pl.BlockSpec((tile_r, lanes), lambda i: (i, 0))],
            out_specs=pl.BlockSpec((tile_r, lanes), lambda i: (i, 0)),
        ),
        compiler_params=pltpu.CompilerParams(
            dimension_semantics=("parallel",),
            vmem_limit_bytes=32 * 1024 * 1024,   # safe on v5e/v6e/v7x
        ),
    )(x2d)

    if padded:
        return out2d.reshape(-1)[:n].reshape(orig_shape)
    return out2d.reshape(orig_shape)


def _reference(x, a=A_VALUE):
    y = x + 3.0
    lr6 = jnp.minimum(6.0, jnp.maximum(a * y, y))
    return x * lr6 / 6.0


if __name__ == "__main__":
    key = jax.random.PRNGKey(0)

    # Primary test: NCHW shape from the module spec -> (4, 512) slab, no pad.
    x = jax.random.normal(key, (2, 4, 16, 16), dtype=jnp.float32) * 4.0
    out = jax.block_until_ready(leaky_hswish(x))
    ref = _reference(x)
    assert out.shape == x.shape and out.dtype == x.dtype
    assert jnp.allclose(out, ref, atol=1e-6, rtol=1e-5), "mismatch vs reference"

    # Secondary test: odd size (exercises the ragged fall-back pad path).
    x2 = jax.random.normal(jax.random.PRNGKey(1), (3, 5, 7, 11),
                           dtype=jnp.float32) * 4.0
    out2 = jax.block_until_ready(leaky_hswish(x2))
    ref2 = _reference(x2)
    assert out2.shape == x2.shape and out2.dtype == x2.dtype
    assert jnp.allclose(out2, ref2, atol=1e-6, rtol=1e-5), "mismatch (padded case)"

    # Tertiary test: large tile-aligned input (multi-step grid, ragged last block).
    x3 = jax.random.normal(jax.random.PRNGKey(2), (8, 16, 72, 128),
                           dtype=jnp.float32) * 4.0
    out3 = jax.block_until_ready(leaky_hswish(x3))
    ref3 = _reference(x3)
    assert jnp.allclose(out3, ref3, atol=1e-6, rtol=1e-5), "mismatch (tiled case)"

    print("KERNEL_OK")
</pallas_src>

<mosaic_0001>
module attributes {stable_mosaic.version = 11 : i64} {
  func.func @_leaky_hswish_kernel(%arg0: i32, %arg1: memref<4x512xf32, #tpu.memory_space<vmem>>, %arg2: memref<4x512xf32, #tpu.memory_space<vmem>>) attributes {dimension_semantics = [#tpu.dimension_semantics<parallel>], iteration_bounds = array<i64: 1>, scalar_prefetch = 0 : i64, scratch_operands = 0 : i64, tpu.core_type = #tpu.core_type<tc>, window_params = [{transform_indices = @transform_0, window_bounds = array<i64: 4, 512>}, {transform_indices = @transform_1, window_bounds = array<i64: 4, 512>}]} {
    %c0 = arith.constant 0 : index
    %c0_0 = arith.constant 0 : index
    %0 = vector.load %arg1[%c0, %c0_0] : memref<4x512xf32, #tpu.memory_space<vmem>>, vector<4x512xf32>
    %cst = arith.constant 3.000000e+00 : f32
    %1 = vector.broadcast %cst : f32 to vector<4x512xf32>
    %2 = arith.addf %0, %1 : vector<4x512xf32>
    %cst_1 = arith.constant 1.000000e-03 : f32
    %3 = vector.broadcast %cst_1 : f32 to vector<4x512xf32>
    %4 = arith.mulf %3, %2 : vector<4x512xf32>
    %5 = arith.maximumf %4, %2 : vector<4x512xf32>
    %cst_2 = arith.constant 6.000000e+00 : f32
    %6 = vector.broadcast %cst_2 : f32 to vector<4x512xf32>
    %7 = arith.minimumf %6, %5 : vector<4x512xf32>
    %8 = arith.mulf %0, %7 : vector<4x512xf32>
    %cst_3 = arith.constant 0.166666672 : f32
    %9 = vector.broadcast %cst_3 : f32 to vector<4x512xf32>
    %10 = arith.mulf %8, %9 : vector<4x512xf32>
    %c0_4 = arith.constant 0 : index
    %c0_5 = arith.constant 0 : index
    %11 = vector.load %arg2[%c0_4, %c0_5] : memref<4x512xf32, #tpu.memory_space<vmem>>, vector<4x512xf32>
    tpu.vector_store %arg2[%c0_4, %c0_5], %10 {strides = array<i32>} : memref<4x512xf32, #tpu.memory_space<vmem>>, vector<4x512xf32>,
    return
  }
  func.func @transform_0(%arg0: i32) -> (i32, i32) {
    %c0_i32 = arith.constant 0 : i32
    %c0_i32_0 = arith.constant 0 : i32
    return %arg0, %c0_i32 : i32, i32
  }
  func.func @transform_1(%arg0: i32) -> (i32, i32) {
    %c0_i32 = arith.constant 0 : i32
    %c0_i32_0 = arith.constant 0 : i32
    return %arg0, %c0_i32 : i32, i32
  }
}

</mosaic_0001>

<llo_original>
// kernel: tpu_custom_call.1
$region0: #{tpu_custom_call.1}
  #allocation0 [shape = 'u32[]', space=smem, size = 0x4, offset = 0x4, fixed_abs, tag = 'smem constant byte address 0x4 - core index']
  #allocation1 [shape = 'u32[144,128]{1,0:T(1,128)}', space=vmem, size = 0x12000, scoped, tag = 'internal scratch']
  %s0 = inlined_call_operand.hbm [shape: f32[4,512], index: 0, kind: input, shape index: {}]
  %s1 = inlined_call_operand.hbm [shape: f32[4,512], index: 1, kind: output, shape index: {}]
  %s2 = sld [smem:[#allocation0]]
  $region18: #{tpu_custom_call.1} parent=0
    _
  %s4 = ssub.s32 1, %s2
  %s5 = scalar_select 0, %s4, %s2
  $region1: #{tpu_custom_call.1} parent=0
    #allocation2 [shape = 'u8[8192]{0}', space=vmem, size = 0x2000, scoped, tag = 'input window, operand 0, single buffered']
    #allocation3 [shape = 's32[1]{0}', space=sflag, size = 0x4, scoped, tag = 'scoped memory for tpu_custom_call.1']
    #allocation4 [shape = 's32[1]{0}', space=sflag, size = 0x4, scoped, tag = 'scoped memory for tpu_custom_call.1']
    #allocation5 [shape = 'u8[8192]{0}', space=vmem, size = 0x2000, scoped, tag = 'output window, operand 0, single buffered']
    %6 = vsyncpa [#allocation3], 0
    %7 = vsyncpa [#allocation4], 0
    // Predicated region
    $region2: #{tpu_custom_call.1} parent=1 // pred_check
      _
    $region3: #{tpu_custom_call.1} parent=1 // pred_check_branch
      %9 = sbr.rel (0) target = $region5
    $region4: #{tpu_custom_call.1} parent=1 // pred_region
      %s11 = ssub.s32 256, 256
      %12 = vsyncadd [#allocation3], %s11
      %s14 = sshll.u32 [#allocation2], 4
      %s15 = int_to_ptr.vmem [resolvable:$true] %s14
      %17 = dma.hbm_to_vmem [thread:$0]  %s0, 256, %s15, [#allocation3]
    $region5: #{tpu_custom_call.1} parent=1 // pred_fallthru
      _
    // Predicated region
    $region6: #{tpu_custom_call.1} parent=1 // pred_check
      _
    $region7: #{tpu_custom_call.1} parent=1 // pred_check_branch
      %19 = sbr.rel (0) target = $region9
    $region8: #{tpu_custom_call.1} parent=1 // pred_region
      %20 = dma.done [#allocation3], 256
    $region9: #{tpu_custom_call.1} parent=1 // pred_fallthru
      _
    %v21 = vld [vmem:[#allocation2] sm:$0xff]
    %v22 = vld [vmem:[#allocation2 + $0x8] sm:$0xff]
    %v23 = vadd.f32 %v21, 3.0
    %v24 = vadd.f32 %v22, 3.0
    %v25 = vmul.f32 %v23, 0.001
    %v26 = vmul.f32 %v24, 0.001
    %v27 = vmax.f32 %v25, %v23
    %v28 = vmax.f32 %v26, %v24
    %v29 = vmin.f32 %v27, 6.0
    %v30 = vmin.f32 %v28, 6.0
    %v31 = vmul.f32 %v21, %v29
    %v32 = vmul.f32 %v22, %v30
    %v33 = vmul.f32 %v31, 0.16666667
    %v34 = vmul.f32 %v32, 0.16666667
    %35 = vst [vmem:[#allocation5] sm:$0xff] %v33
    %36 = vst [vmem:[#allocation5 + $0x8] sm:$0xff] %v34
    // Predicated region
    $region10: #{tpu_custom_call.1} parent=1 // pred_check
      _
    $region11: #{tpu_custom_call.1} parent=1 // pred_check_branch
      %38 = sbr.rel (0) target = $region13
    $region12: #{tpu_custom_call.1} parent=1 // pred_region
      %s40 = ssub.s32 256, 256
      %41 = vsyncadd [#allocation4], %s40
      %s43 = sshll.u32 [#allocation5], 4
      %s44 = int_to_ptr.vmem [resolvable:$true] %s43
      %46 = dma.vmem_to_hbm [thread:$0]  %s44, 256, %s1, [#allocation4]
    $region13: #{tpu_custom_call.1} parent=1 // pred_fallthru
      _
    // Predicated region
    $region14: #{tpu_custom_call.1} parent=1 // pred_check
      _
    $region15: #{tpu_custom_call.1} parent=1 // pred_check_branch
      %48 = sbr.rel (0) target = $region17
    $region16: #{tpu_custom_call.1} parent=1 // pred_region
      %49 = dma.done [#allocation4], 256
    $region17: #{tpu_custom_call.1} parent=1 // pred_fallthru
      _
    %50 = vsyncpa [#allocation3], 1
    %51 = vsyncpa [#allocation4], 1

</llo_original>
